<compile_context>
chip_gen: v5e
topology: v5e:2x2
jax: 0.10.0
libtpu: 0.0.40
codegen_flags: <defaults>
</compile_context>

<pallas_src>
import functools

import jax
import jax.numpy as jnp
from jax.experimental import pallas as pl
from jax.experimental.pallas import tpu as pltpu


def _round_up(x, m):
    return ((x + m - 1) // m) * m


def rnn_fc_kernel(x_ref, wih_ref, whh_ref, b_ref, wfc_ref, bfc_ref, out_ref,
                  xw_ref, *, seq_len, batch_p):
    """Whole forward pass in one invocation.

    x_ref   : (T*Bp, Fp)  time-major, zero-padded input
    wih_ref : (Fp, Hp)    W_ih^T (zero-padded)
    whh_ref : (Hp, Hp)    W_hh^T (zero-padded)
    b_ref   : (1, Hp)     b_ih + b_hh (zero-padded)
    wfc_ref : (Hp, Op)    W_fc^T (zero-padded)
    bfc_ref : (1, Op)     b_fc (zero-padded)
    out_ref : (Bp, Op)    fc(h_T), padded
    xw_ref  : (T*Bp, Hp)  VMEM scratch for the hoisted input projection
    """
    # (1) Hoisted input projection: all T time steps in ONE MXU matmul, with
    #     the combined RNN bias folded in.  Staged into VMEM scratch so the
    #     unrolled recurrence only keeps one (Bp, Hp) row-group live at a time
    #     (keeps the loop spill-free: whh 16 vregs + h/x_t/temps << 64).
    xw_ref[...] = (
        jnp.dot(x_ref[...], wih_ref[...], preferred_element_type=jnp.float32)
        + b_ref[...]
    )  # (T*Bp, Hp)

    # Loop-invariant recurrent weight; Mosaic hoists its MXU RHS push out of
    # the fully unrolled loop (explicit matmul_push_rhs pinning not needed for
    # a single 128x128 f32 RHS).
    whh = whh_ref[...]

    # (2) t = 0: h_0 = 0, so the recurrent matmul contributes nothing; skip it
    #     and start the serial MXU chain at t = 1.
    h = jnp.tanh(xw_ref[0:batch_p, :])

    # (3) Serial recurrence, fully unrolled (static T); every slice is a
    #     static, sublane-aligned (Bp, Hp) window of the projected input.
    for t in range(1, seq_len):
        x_t = xw_ref[t * batch_p:(t + 1) * batch_p, :]
        h = jnp.tanh(x_t + jnp.dot(h, whh, preferred_element_type=jnp.float32))

    # (4) Final linear layer on the last hidden state (lane-dense padded store).
    out_ref[...] = (
        jnp.dot(h, wfc_ref[...], preferred_element_type=jnp.float32)
        + bfc_ref[...]
    ).astype(out_ref.dtype)


def prepare_weights(w_ih, w_hh, b_ih, b_hh, w_fc, b_fc):
    """One-time padding/transposition of the PyTorch-convention weights.

    w_ih: (H, F), w_hh: (H, H), b_ih/b_hh: (H,), w_fc: (O, H), b_fc: (O,).
    Returns lane/sublane-aligned, zero-padded, transposed f32 tensors that are
    reused across every forward call (no per-call weight-prep XLA ops).
    """
    f32 = jnp.float32
    H, F = w_ih.shape
    O = w_fc.shape[0]
    Fp = _round_up(F, 128)   # 161 -> 256
    Hp = _round_up(H, 128)   # 108 -> 128
    Op = _round_up(O, 128)   # 10  -> 128

    wih_t = jnp.zeros((Fp, Hp), f32).at[:F, :H].set(jnp.transpose(w_ih).astype(f32))
    whh_t = jnp.zeros((Hp, Hp), f32).at[:H, :H].set(jnp.transpose(w_hh).astype(f32))
    b_rnn = jnp.zeros((1, Hp), f32).at[0, :H].set((b_ih + b_hh).astype(f32))
    wfc_t = jnp.zeros((Hp, Op), f32).at[:H, :O].set(jnp.transpose(w_fc).astype(f32))
    bfc_p = jnp.zeros((1, Op), f32).at[0, :O].set(b_fc.astype(f32))
    return (wih_t, whh_t, b_rnn, wfc_t, bfc_p)


@functools.partial(jax.jit, static_argnames=("out_size",))
def rnn_model_forward(x, wih_t, whh_t, b_rnn, wfc_t, bfc_p, *, out_size):
    """x: (B, T, F); padded weights from prepare_weights(); out_size = O."""
    f32 = jnp.float32
    B, T, F = x.shape
    Fp, Hp = wih_t.shape
    Op = wfc_t.shape[1]
    Bp = _round_up(B, 8)     # 2 -> 8 (full sublane utilization)

    # Time-major, zero-padded, flattened to one 2-D slab: transpose + single
    # jnp.pad + reshape; the producer is allowed to fuse into the pallas_call
    # input DMA via allow_input_fusion below.
    x_tm = jnp.transpose(x.astype(f32), (1, 0, 2))                      # (T, B, F)
    x_2d = jnp.pad(x_tm, ((0, 0), (0, Bp - B), (0, Fp - F))).reshape(T * Bp, Fp)

    kernel = functools.partial(rnn_fc_kernel, seq_len=T, batch_p=Bp)

    flops = 2 * (T * Bp * Fp * Hp + (T - 1) * Bp * Hp * Hp + Bp * Hp * Op)
    transcendentals = T * Bp * Hp
    bytes_accessed = 4 * (T * Bp * Fp + Fp * Hp + Hp * Hp + Hp
                          + Hp * Op + Op + Bp * Op)

    vmem_spec = pl.BlockSpec(memory_space=pltpu.MemorySpace.VMEM)

    # Single invocation, no grid: all operands are whole-array VMEM blocks
    # (~0.4 MiB total -> fits every generation, incl. v7x's 64 MiB, easily).
    out_p = pl.pallas_call(
        kernel,
        out_shape=jax.ShapeDtypeStruct((Bp, Op), f32),
        in_specs=[vmem_spec] * 6,
        out_specs=vmem_spec,
        scratch_shapes=[pltpu.VMEM((T * Bp, Hp), f32)],
        cost_estimate=pl.CostEstimate(flops=flops,
                                      transcendentals=transcendentals,
                                      bytes_accessed=bytes_accessed),
        compiler_params=pltpu.CompilerParams(
            allow_input_fusion=[True, False, False, False, False, False]),
    )(x_2d, wih_t, whh_t, b_rnn, wfc_t, bfc_p)

    return out_p[:B, :out_size]


def reference_forward(x, w_ih, w_hh, b_ih, b_hh, w_fc, b_fc):
    """Pure-JAX reference matching torch semantics."""
    B, T, F = x.shape
    H = w_hh.shape[0]
    h = jnp.zeros((B, H), jnp.float32)
    for t in range(T):
        h = jnp.tanh(x[:, t, :] @ w_ih.T + b_ih + h @ w_hh.T + b_hh)
    return h @ w_fc.T + b_fc


if __name__ == "__main__":
    # Module hyper-params (from the PyTorch file); output_size chosen small.
    input_size = 161
    hidden_size = 108
    output_size = 10
    batch = 2
    seq_len = 8

    key = jax.random.PRNGKey(0)
    k_x, k1, k2, k3, k4, k5, k6 = jax.random.split(key, 7)

    # Deterministic init mimicking PyTorch's uniform(-1/sqrt(H), 1/sqrt(H)).
    bound = 1.0 / jnp.sqrt(jnp.float32(hidden_size))
    w_ih = jax.random.uniform(k1, (hidden_size, input_size), jnp.float32, -bound, bound)
    w_hh = jax.random.uniform(k2, (hidden_size, hidden_size), jnp.float32, -bound, bound)
    b_ih = jax.random.uniform(k3, (hidden_size,), jnp.float32, -bound, bound)
    b_hh = jax.random.uniform(k4, (hidden_size,), jnp.float32, -bound, bound)
    w_fc = jax.random.uniform(k5, (output_size, hidden_size), jnp.float32, -bound, bound)
    b_fc = jax.random.uniform(k6, (output_size,), jnp.float32, -bound, bound)

    x = jax.random.normal(k_x, (batch, seq_len, input_size), jnp.float32)

    # One-time weight prep (hoisted out of the per-call path).
    packed = prepare_weights(w_ih, w_hh, b_ih, b_hh, w_fc, b_fc)
    packed = jax.block_until_ready(packed)

    out = rnn_model_forward(x, *packed, out_size=output_size)
    out = jax.block_until_ready(out)

    ref = reference_forward(x, w_ih, w_hh, b_ih, b_hh, w_fc, b_fc)
    assert out.shape == (batch, output_size)
    assert jnp.allclose(out, ref, atol=1e-4, rtol=1e-4), (out, ref)

    print("KERNEL_OK")
</pallas_src>

<mosaic_0001>
module attributes {stable_mosaic.version = 11 : i64} {
  func.func @rnn_fc_kernel(%arg0: memref<64x256xf32, #tpu.memory_space<vmem>>, %arg1: memref<256x128xf32, #tpu.memory_space<vmem>>, %arg2: memref<128x128xf32, #tpu.memory_space<vmem>>, %arg3: memref<1x128xf32, #tpu.memory_space<vmem>>, %arg4: memref<128x128xf32, #tpu.memory_space<vmem>>, %arg5: memref<1x128xf32, #tpu.memory_space<vmem>>, %arg6: memref<8x128xf32, #tpu.memory_space<vmem>>, %arg7: memref<64x128xf32, #tpu.memory_space<vmem>>) attributes {dimension_semantics = [], scalar_prefetch = 0 : i64, scratch_operands = 1 : i64, tpu.core_type = #tpu.core_type<tc>} {
    %c0 = arith.constant 0 : index
    %c0_0 = arith.constant 0 : index
    %0 = vector.load %arg0[%c0, %c0_0] : memref<64x256xf32, #tpu.memory_space<vmem>>, vector<64x256xf32>
    %c0_1 = arith.constant 0 : index
    %c0_2 = arith.constant 0 : index
    %1 = vector.load %arg1[%c0_1, %c0_2] : memref<256x128xf32, #tpu.memory_space<vmem>>, vector<256x128xf32>
    %cst = arith.constant dense<0.000000e+00> : vector<64x128xf32>
    %2 = tpu.matmul %0, %1, %cst {dimension_numbers = #tpu.dot_dimension_numbers<[1], [0], [0], [1], [0, 0, 1, 1], [], []>} : vector<64x256xf32>, vector<256x128xf32>, vector<64x128xf32> -> vector<64x128xf32>
    %c0_3 = arith.constant 0 : index
    %c0_4 = arith.constant 0 : index
    %3 = vector.load %arg3[%c0_3, %c0_4] : memref<1x128xf32, #tpu.memory_space<vmem>>, vector<1x128xf32>
    %4 = vector.broadcast %3 : vector<1x128xf32> to vector<64x128xf32>
    %5 = arith.addf %2, %4 : vector<64x128xf32>
    %c0_5 = arith.constant 0 : index
    %c0_6 = arith.constant 0 : index
    %6 = vector.load %arg7[%c0_5, %c0_6] : memref<64x128xf32, #tpu.memory_space<vmem>>, vector<64x128xf32>
    tpu.vector_store %arg7[%c0_5, %c0_6], %5 {strides = array<i32>} : memref<64x128xf32, #tpu.memory_space<vmem>>, vector<64x128xf32>,
    %c0_7 = arith.constant 0 : index
    %c0_8 = arith.constant 0 : index
    %7 = vector.load %arg2[%c0_7, %c0_8] : memref<128x128xf32, #tpu.memory_space<vmem>>, vector<128x128xf32>
    %c0_9 = arith.constant 0 : index
    %c0_10 = arith.constant 0 : index
    %8 = vector.load %arg7[%c0_9, %c0_10] : memref<64x128xf32, #tpu.memory_space<vmem>>, vector<8x128xf32>
    %9 = math.tanh %8 : vector<8x128xf32>
    %c8 = arith.constant 8 : index
    %c0_11 = arith.constant 0 : index
    %10 = vector.load %arg7[%c8, %c0_11] : memref<64x128xf32, #tpu.memory_space<vmem>>, vector<8x128xf32>
    %cst_12 = arith.constant dense<0.000000e+00> : vector<8x128xf32>
    %11 = tpu.matmul %9, %7, %cst_12 {dimension_numbers = #tpu.dot_dimension_numbers<[1], [0], [0], [1], [0, 0, 1, 1], [], []>} : vector<8x128xf32>, vector<128x128xf32>, vector<8x128xf32> -> vector<8x128xf32>
    %12 = arith.addf %10, %11 : vector<8x128xf32>
    %13 = math.tanh %12 : vector<8x128xf32>
    %c16 = arith.constant 16 : index
    %c0_13 = arith.constant 0 : index
    %14 = vector.load %arg7[%c16, %c0_13] : memref<64x128xf32, #tpu.memory_space<vmem>>, vector<8x128xf32>
    %cst_14 = arith.constant dense<0.000000e+00> : vector<8x128xf32>
    %15 = tpu.matmul %13, %7, %cst_14 {dimension_numbers = #tpu.dot_dimension_numbers<[1], [0], [0], [1], [0, 0, 1, 1], [], []>} : vector<8x128xf32>, vector<128x128xf32>, vector<8x128xf32> -> vector<8x128xf32>
    %16 = arith.addf %14, %15 : vector<8x128xf32>
    %17 = math.tanh %16 : vector<8x128xf32>
    %c24 = arith.constant 24 : index
    %c0_15 = arith.constant 0 : index
    %18 = vector.load %arg7[%c24, %c0_15] : memref<64x128xf32, #tpu.memory_space<vmem>>, vector<8x128xf32>
    %cst_16 = arith.constant dense<0.000000e+00> : vector<8x128xf32>
    %19 = tpu.matmul %17, %7, %cst_16 {dimension_numbers = #tpu.dot_dimension_numbers<[1], [0], [0], [1], [0, 0, 1, 1], [], []>} : vector<8x128xf32>, vector<128x128xf32>, vector<8x128xf32> -> vector<8x128xf32>
    %20 = arith.addf %18, %19 : vector<8x128xf32>
    %21 = math.tanh %20 : vector<8x128xf32>
    %c32 = arith.constant 32 : index
    %c0_17 = arith.constant 0 : index
    %22 = vector.load %arg7[%c32, %c0_17] : memref<64x128xf32, #tpu.memory_space<vmem>>, vector<8x128xf32>
    %cst_18 = arith.constant dense<0.000000e+00> : vector<8x128xf32>
    %23 = tpu.matmul %21, %7, %cst_18 {dimension_numbers = #tpu.dot_dimension_numbers<[1], [0], [0], [1], [0, 0, 1, 1], [], []>} : vector<8x128xf32>, vector<128x128xf32>, vector<8x128xf32> -> vector<8x128xf32>
    %24 = arith.addf %22, %23 : vector<8x128xf32>
    %25 = math.tanh %24 : vector<8x128xf32>
    %c40 = arith.constant 40 : index
    %c0_19 = arith.constant 0 : index
    %26 = vector.load %arg7[%c40, %c0_19] : memref<64x128xf32, #tpu.memory_space<vmem>>, vector<8x128xf32>
    %cst_20 = arith.constant dense<0.000000e+00> : vector<8x128xf32>
    %27 = tpu.matmul %25, %7, %cst_20 {dimension_numbers = #tpu.dot_dimension_numbers<[1], [0], [0], [1], [0, 0, 1, 1], [], []>} : vector<8x128xf32>, vector<128x128xf32>, vector<8x128xf32> -> vector<8x128xf32>
    %28 = arith.addf %26, %27 : vector<8x128xf32>
    %29 = math.tanh %28 : vector<8x128xf32>
    %c48 = arith.constant 48 : index
    %c0_21 = arith.constant 0 : index
    %30 = vector.load %arg7[%c48, %c0_21] : memref<64x128xf32, #tpu.memory_space<vmem>>, vector<8x128xf32>
    %cst_22 = arith.constant dense<0.000000e+00> : vector<8x128xf32>
    %31 = tpu.matmul %29, %7, %cst_22 {dimension_numbers = #tpu.dot_dimension_numbers<[1], [0], [0], [1], [0, 0, 1, 1], [], []>} : vector<8x128xf32>, vector<128x128xf32>, vector<8x128xf32> -> vector<8x128xf32>
    %32 = arith.addf %30, %31 : vector<8x128xf32>
    %33 = math.tanh %32 : vector<8x128xf32>
    %c56 = arith.constant 56 : index
    %c0_23 = arith.constant 0 : index
    %34 = vector.load %arg7[%c56, %c0_23] : memref<64x128xf32, #tpu.memory_space<vmem>>, vector<8x128xf32>
    %cst_24 = arith.constant dense<0.000000e+00> : vector<8x128xf32>
    %35 = tpu.matmul %33, %7, %cst_24 {dimension_numbers = #tpu.dot_dimension_numbers<[1], [0], [0], [1], [0, 0, 1, 1], [], []>} : vector<8x128xf32>, vector<128x128xf32>, vector<8x128xf32> -> vector<8x128xf32>
    %36 = arith.addf %34, %35 : vector<8x128xf32>
    %37 = math.tanh %36 : vector<8x128xf32>
    %c0_25 = arith.constant 0 : index
    %c0_26 = arith.constant 0 : index
    %38 = vector.load %arg4[%c0_25, %c0_26] : memref<128x128xf32, #tpu.memory_space<vmem>>, vector<128x128xf32>
    %cst_27 = arith.constant dense<0.000000e+00> : vector<8x128xf32>
    %39 = tpu.matmul %37, %38, %cst_27 {dimension_numbers = #tpu.dot_dimension_numbers<[1], [0], [0], [1], [0, 0, 1, 1], [], []>} : vector<8x128xf32>, vector<128x128xf32>, vector<8x128xf32> -> vector<8x128xf32>
    %c0_28 = arith.constant 0 : index
    %c0_29 = arith.constant 0 : index
    %40 = vector.load %arg5[%c0_28, %c0_29] : memref<1x128xf32, #tpu.memory_space<vmem>>, vector<1x128xf32>
    %41 = vector.broadcast %40 : vector<1x128xf32> to vector<8x128xf32>
    %42 = arith.addf %39, %41 : vector<8x128xf32>
    %c0_30 = arith.constant 0 : index
    %c0_31 = arith.constant 0 : index
    %43 = vector.load %arg6[%c0_30, %c0_31] : memref<8x128xf32, #tpu.memory_space<vmem>>, vector<8x128xf32>
    tpu.vector_store %arg6[%c0_30, %c0_31], %42 {strides = array<i32>} : memref<8x128xf32, #tpu.memory_space<vmem>>, vector<8x128xf32>,
    return
  }
}

</mosaic_0001>

<llo_original>
// kernel: rnn_model_forward.2
$region0: #{rnn_model_forward.2}
  #allocation0 [shape = 'u32[]', space=smem, size = 0x4, offset = 0x4, fixed_abs, tag = 'smem constant byte address 0x4 - core index']
  #allocation1 [shape = 'u32[72,128]{1,0:T(1,128)}', space=vmem, size = 0x9000, scoped, tag = 'internal scratch']
  #allocation2 [shape = 'f32[64,128]{1,0:T(8,128)}', space=vmem, size = 0x8000, scoped, tag = 'scratch operand']
  #allocation3 [shape = 'u32[2048]{0}', space=vmem, size = 0x2000, scoped, tag = 'scoped memory for rnn_model_forward.2']
  #allocation4 [shape = 'u32[2048]{0}', space=vmem, size = 0x2000, scoped, tag = 'scoped memory for rnn_model_forward.2']
  #allocation5 [shape = 'u32[2048]{0}', space=vmem, size = 0x2000, scoped, tag = 'scoped memory for rnn_model_forward.2']
  #allocation6 [shape = 'u32[2048]{0}', space=vmem, size = 0x2000, scoped, tag = 'scoped memory for rnn_model_forward.2']
  #allocation7 [shape = 'u32[2048]{0}', space=vmem, size = 0x2000, scoped, tag = 'scoped memory for rnn_model_forward.2']
  %s0 = inlined_call_operand.hbm [shape: f32[256,128], index: 0, kind: input, shape index: {}]
  %s1 = inlined_call_operand.hbm [shape: f32[128,128], index: 1, kind: input, shape index: {}]
  %s2 = inlined_call_operand.vmem [shape: f32[1,128], index: 2, kind: input, shape index: {}]
  %s3 = inlined_call_operand.hbm [shape: f32[128,128], index: 3, kind: input, shape index: {}]
  %s4 = inlined_call_operand.vmem [shape: f32[1,128], index: 4, kind: input, shape index: {}]
  %s5 = inlined_call_operand.vmem [shape: f32[8,2,161], index: 5, kind: input, shape index: {}]
  %s6 = inlined_call_operand.<no memory space> [shape: f32[], index: 6, kind: input, shape index: {}]
  %s7 = inlined_call_operand.vmem [shape: f32[8,128], index: 7, kind: output, shape index: {}]
  %s8 = sld [smem:[#allocation0]]
  $region46: #{rnn_model_forward.2} parent=0
    _
  %s10 = ssub.s32 1, %s8
  %s11 = scalar_select 0, %s10, %s8
  %v12 = vstv %s6
  $region1: #{rnn_model_forward.2} parent=0
    #allocation8 [shape = 'u8[131072]{0}', space=vmem, size = 0x20000, scoped, tag = 'input window, operand 1, single buffered']
    #allocation9 [shape = 's32[1]{0}', space=sflag, size = 0x4, scoped, tag = 'scoped memory for rnn_model_forward.2']
    #allocation10 [shape = 'u8[65536]{0}', space=vmem, size = 0x10000, scoped, tag = 'input window, operand 2, single buffered']
    #allocation11 [shape = 's32[1]{0}', space=sflag, size = 0x4, scoped, tag = 'scoped memory for rnn_model_forward.2']
    #allocation12 [shape = 'u8[65536]{0}', space=vmem, size = 0x10000, scoped, tag = 'input window, operand 4, single buffered']
    #allocation13 [shape = 'u8[65536]{0}', space=vmem, size = 0x10000, dematerialized = true, scoped, tag = 'FusionAdapter Buffer %pad_bitcast_fusion.1 = f32[64,256]{1,0:T(8,128)} fusion(%param_5.1, %param_6), kind=kLoop, calls=%fused_computation.clone.clone, metadata={op_name="jit(rnn_model_forward)/reshape" stack_frame_id=9}']
    %13 = vsyncpa [#allocation9], 0
    %14 = vsyncpa [#allocation11], 0
    // Predicated region
    $region2: #{rnn_model_forward.2} parent=1 // pred_check
      _
    $region3: #{rnn_model_forward.2} parent=1 // pred_check_branch
      %16 = sbr.rel (0) target = $region5
    $region4: #{rnn_model_forward.2} parent=1 // pred_region
      _
    $region5: #{rnn_model_forward.2} parent=1 // pred_fallthru
      _
    // Predicated region
    $region6: #{rnn_model_forward.2} parent=1 // pred_check
      _
    $region7: #{rnn_model_forward.2} parent=1 // pred_check_branch
      %18 = sbr.rel (0) target = $region9
    $region8: #{rnn_model_forward.2} parent=1 // pred_region
      %20 = vsyncadd [#allocation9], 0
      %s21 = sshll.u32 %s0, 4
      %s22 = int_to_ptr.hbm [resolvable:$true] %s21
      %s23 = sshll.u32 [#allocation8], 4
      %s24 = int_to_ptr.vmem [resolvable:$true] %s23
      %29 = dma.hbm_to_vmem [thread:$0]  %s22, 4096, %s24, [#allocation9], 128, 128, 8
    $region9: #{rnn_model_forward.2} parent=1 // pred_fallthru
      _
    // Predicated region
    $region10: #{rnn_model_forward.2} parent=1 // pred_check
      _
    $region11: #{rnn_model_forward.2} parent=1 // pred_check_branch
      %31 = sbr.rel (0) target = $region13
    $region12: #{rnn_model_forward.2} parent=1 // pred_region
      %33 = vsyncadd [#allocation11], 0
      %s34 = sshll.u32 %s1, 4
      %s35 = int_to_ptr.hbm [resolvable:$true] %s34
      %s36 = sshll.u32 [#allocation10], 4
      %s37 = int_to_ptr.vmem [resolvable:$true] %s36
      %42 = dma.hbm_to_vmem [thread:$0]  %s35, 2048, %s37, [#allocation11], 128, 128, 8
    $region13: #{rnn_model_forward.2} parent=1 // pred_fallthru
      _
    // Predicated region
    $region14: #{rnn_model_forward.2} parent=1 // pred_check
      _
    $region15: #{rnn_model_forward.2} parent=1 // pred_check_branch
      %44 = sbr.rel (0) target = $region17
    $region16: #{rnn_model_forward.2} parent=1 // pred_region
      _
    $region17: #{rnn_model_forward.2} parent=1 // pred_fallthru
      _
    // Predicated region
    $region18: #{rnn_model_forward.2} parent=1 // pred_check
      _
    $region19: #{rnn_model_forward.2} parent=1 // pred_check_branch
      %46 = sbr.rel (0) target = $region21
    $region20: #{rnn_model_forward.2} parent=1 // pred_region
      %48 = vsyncadd [#allocation11], 0
      %s49 = sshll.u32 %s3, 4
      %s50 = int_to_ptr.hbm [resolvable:$true] %s49
      %s51 = sshll.u32 [#allocation12], 4
      %s52 = int_to_ptr.vmem [resolvable:$true] %s51
      %57 = dma.hbm_to_vmem [thread:$0]  %s50, 2048, %s52, [#allocation11], 128, 128, 8
    $region21: #{rnn_model_forward.2} parent=1 // pred_fallthru
      _
    // Predicated region
    $region22: #{rnn_model_forward.2} parent=1 // pred_check
      _
    $region23: #{rnn_model_forward.2} parent=1 // pred_check_branch
      %59 = sbr.rel (0) target = $region25
    $region24: #{rnn_model_forward.2} parent=1 // pred_region
      _
    $region25: #{rnn_model_forward.2} parent=1 // pred_fallthru
      _
    // Predicated region
    $region26: #{rnn_model_forward.2} parent=1 // pred_check
      _
    $region27: #{rnn_model_forward.2} parent=1 // pred_check_branch
      %61 = sbr.rel (0) target = $region29
    $region28: #{rnn_model_forward.2} parent=1 // pred_region
      %63 = dma.done [#allocation9], 4096
    $region29: #{rnn_model_forward.2} parent=1 // pred_fallthru
      _
    // Predicated region
    $region30: #{rnn_model_forward.2} parent=1 // pred_check
      _
    $region31: #{rnn_model_forward.2} parent=1 // pred_check_branch
      %65 = sbr.rel (0) target = $region33
    $region32: #{rnn_model_forward.2} parent=1 // pred_region
      %67 = dma.done [#allocation11], 2048
    $region33: #{rnn_model_forward.2} parent=1 // pred_fallthru
      _
    // Predicated region
    $region34: #{rnn_model_forward.2} parent=1 // pred_check
      _
    $region35: #{rnn_model_forward.2} parent=1 // pred_check_branch
      %69 = sbr.rel (0) target = $region37
    $region36: #{rnn_model_forward.2} parent=1 // pred_region
      %71 = dma.done [#allocation11], 2048
    $region37: #{rnn_model_forward.2} parent=1 // pred_fallthru
      _
    %v72 = vld [vmem:[%s5] sm:$0x3]
    %v73 = vlaneseq
    %v74 = vshrl.u32 %v73, 7
    %vm76 = vcmp.lt.s32.totalorder %v74, 2
    %v77 = vsel %vm76, %v72, %v12
    %v78 = vlaneseq
    %v79 = vand.u32 %v78, 127
    %vm81 = vcmp.lt.s32.totalorder %v79, 161
    %v82 = vsel %vm81, %v77, %v12
    %s84 = ssub.s32 256, 1
    %85 = vst [vmem:[#allocation13] sm:%s84] %v82
    %s86 = scalar_lea.vmem %s5, 2
    %v87 = vld [vmem:[%s86] sm:$0x3]
    %v88 = vlaneseq
    %v89 = vshrl.u32 %v88, 7
    %vm91 = vcmp.lt.s32.totalorder %v89, 2
    %v92 = vsel %vm91, %v87, %v12
    %v93 = vlaneseq
    %v94 = vand.u32 %v93, 127
    %v95 = vadd.s32 %v94, 128
    %vm96 = vcmp.lt.s32.totalorder %v95, 161
    %v97 = vsel %vm96, %v92, %v12
    %s98 = scalar_lea.vmem [#allocation13], 8
    %s100 = ssub.s32 256, 1
    %101 = vst [vmem:[%s98] sm:%s100] %v97
    %s102 = scalar_lea.vmem %s5, 4
    %v103 = vld [vmem:[%s102] sm:$0x3]
    %v104 = vlaneseq
    %v105 = vshrl.u32 %v104, 7
    %vm107 = vcmp.lt.s32.totalorder %v105, 2
    %v108 = vsel %vm107, %v103, %v12
    %v109 = vlaneseq
    %v110 = vand.u32 %v109, 127
    %vm112 = vcmp.lt.s32.totalorder %v110, 161
    %v113 = vsel %vm112, %v108, %v12
    %s114 = scalar_lea.vmem [#allocation13], 16
    %s116 = ssub.s32 256, 1
    %117 = vst [vmem:[%s114] sm:%s116] %v113
    %s118 = scalar_lea.vmem %s5, 6
    %v119 = vld [vmem:[%s118] sm:$0x3]
    %v120 = vlaneseq
    %v121 = vshrl.u32 %v120, 7
    %vm123 = vcmp.lt.s32.totalorder %v121, 2
    %v124 = vsel %vm123, %v119, %v12
    %v125 = vlaneseq
    %v126 = vand.u32 %v125, 127
    %v127 = vadd.s32 %v126, 128
    %vm128 = vcmp.lt.s32.totalorder %v127, 161
    %v129 = vsel %vm128, %v124, %v12
    %s130 = scalar_lea.vmem [#allocation13], 24
    %s132 = ssub.s32 256, 1
    %133 = vst [vmem:[%s130] sm:%s132] %v129
    %s134 = scalar_lea.vmem %s5, 8
    %v135 = vld [vmem:[%s134] sm:$0x3]
    %v136 = vlaneseq
    %v137 = vshrl.u32 %v136, 7
    %vm139 = vcmp.lt.s32.totalorder %v137, 2
    %v140 = vsel %vm139, %v135, %v12
    %v141 = vlaneseq
    %v142 = vand.u32 %v141, 127
    %vm144 = vcmp.lt.s32.totalorder %v142, 161
    %v145 = vsel %vm144, %v140, %v12
    %s146 = scalar_lea.vmem [#allocation13], 32
    %s148 = ssub.s32 256, 1
    %149 = vst [vmem:[%s146] sm:%s148] %v145
    %s150 = scalar_lea.vmem %s5, 10
    %v151 = vld [vmem:[%s150] sm:$0x3]
    %v152 = vlaneseq
    %v153 = vshrl.u32 %v152, 7
    %vm155 = vcmp.lt.s32.totalorder %v153, 2
    %v156 = vsel %vm155, %v151, %v12
    %v157 = vlaneseq
    %v158 = vand.u32 %v157, 127
    %v159 = vadd.s32 %v158, 128
    %vm160 = vcmp.lt.s32.totalorder %v159, 161
    %v161 = vsel %vm160, %v156, %v12
    %s162 = scalar_lea.vmem [#allocation13], 40
    %s164 = ssub.s32 256, 1
    %165 = vst [vmem:[%s162] sm:%s164] %v161
    %s166 = scalar_lea.vmem %s5, 12
    %v167 = vld [vmem:[%s166] sm:$0x3]
    %v168 = vlaneseq
    %v169 = vshrl.u32 %v168, 7
    %vm171 = vcmp.lt.s32.totalorder %v169, 2
    %v172 = vsel %vm171, %v167, %v12
    %v173 = vlaneseq
    %v174 = vand.u32 %v173, 127
    %vm176 = vcmp.lt.s32.totalorder %v174, 161
    %v177 = vsel %vm176, %v172, %v12
    %s178 = scalar_lea.vmem [#allocation13], 48
    %s180 = ssub.s32 256, 1
    %181 = vst [vmem:[%s178] sm:%s180] %v177
    %s182 = scalar_lea.vmem %s5, 14
    %v183 = vld [vmem:[%s182] sm:$0x3]
    %v184 = vlaneseq
    %v185 = vshrl.u32 %v184, 7
    %vm187 = vcmp.lt.s32.totalorder %v185, 2
    %v188 = vsel %vm187, %v183, %v12
    %v189 = vlaneseq
    %v190 = vand.u32 %v189, 127
    %v191 = vadd.s32 %v190, 128
    %vm192 = vcmp.lt.s32.totalorder %v191, 161
    %v193 = vsel %vm192, %v188, %v12
    %s194 = scalar_lea.vmem [#allocation13], 56
    %s196 = ssub.s32 256, 1
    %197 = vst [vmem:[%s194] sm:%s196] %v193
    %s198 = scalar_lea.vmem %s5, 16
    %v199 = vld [vmem:[%s198] sm:$0x3]
    %v200 = vlaneseq
    %v201 = vshrl.u32 %v200, 7
    %vm203 = vcmp.lt.s32.totalorder %v201, 2
    %v204 = vsel %vm203, %v199, %v12
    %v205 = vlaneseq
    %v206 = vand.u32 %v205, 127
    %vm208 = vcmp.lt.s32.totalorder %v206, 161
    %v209 = vsel %vm208, %v204, %v12
    %s210 = scalar_lea.vmem [#allocation13], 64
    %s212 = ssub.s32 256, 1
    %213 = vst [vmem:[%s210] sm:%s212] %v209
    %s214 = scalar_lea.vmem %s5, 18
    %v215 = vld [vmem:[%s214] sm:$0x3]
    %v216 = vlaneseq
    %v217 = vshrl.u32 %v216, 7
    %vm219 = vcmp.lt.s32.totalorder %v217, 2
    %v220 = vsel %vm219, %v215, %v12
    %v221 = vlaneseq
    %v222 = vand.u32 %v221, 127
    %v223 = vadd.s32 %v222, 128
    %vm224 = vcmp.lt.s32.totalorder %v223, 161
    %v225 = vsel %vm224, %v220, %v12
    %s226 = scalar_lea.vmem [#allocation13], 72
    %s228 = ssub.s32 256, 1
    %229 = vst [vmem:[%s226] sm:%s228] %v225
    %s230 = scalar_lea.vmem %s5, 20
    %v231 = vld [vmem:[%s230] sm:$0x3]
    %v232 = vlaneseq
    %v233 = vshrl.u32 %v232, 7
    %vm235 = vcmp.lt.s32.totalorder %v233, 2
    %v236 = vsel %vm235, %v231, %v12
    %v237 = vlaneseq
    %v238 = vand.u32 %v237, 127
    %vm240 = vcmp.lt.s32.totalorder %v238, 161
    %v241 = vsel %vm240, %v236, %v12
    %s242 = scalar_lea.vmem [#allocation13], 80
    %s244 = ssub.s32 256, 1
    %245 = vst [vmem:[%s242] sm:%s244] %v241
    %s246 = scalar_lea.vmem %s5, 22
    %v247 = vld [vmem:[%s246] sm:$0x3]
    %v248 = vlaneseq
    %v249 = vshrl.u32 %v248, 7
    %vm251 = vcmp.lt.s32.totalorder %v249, 2
    %v252 = vsel %vm251, %v247, %v12
    %v253 = vlaneseq
    %v254 = vand.u32 %v253, 127
    %v255 = vadd.s32 %v254, 128
    %vm256 = vcmp.lt.s32.totalorder %v255, 161
    %v257 = vsel %vm256, %v252, %v12
    %s258 = scalar_lea.vmem [#allocation13], 88
    %s260 = ssub.s32 256, 1
    %261 = vst [vmem:[%s258] sm:%s260] %v257
    %s262 = scalar_lea.vmem %s5, 24
    %v263 = vld [vmem:[%s262] sm:$0x3]
    %v264 = vlaneseq
    %v265 = vshrl.u32 %v264, 7
    %vm267 = vcmp.lt.s32.totalorder %v265, 2
    %v268 = vsel %vm267, %v263, %v12
    %v269 = vlaneseq
    %v270 = vand.u32 %v269, 127
    %vm272 = vcmp.lt.s32.totalorder %v270, 161
    %v273 = vsel %vm272, %v268, %v12
    %s274 = scalar_lea.vmem [#allocation13], 96
    %s276 = ssub.s32 256, 1
    %277 = vst [vmem:[%s274] sm:%s276] %v273
    %s278 = scalar_lea.vmem %s5, 26
    %v279 = vld [vmem:[%s278] sm:$0x3]
    %v280 = vlaneseq
    %v281 = vshrl.u32 %v280, 7
    %vm283 = vcmp.lt.s32.totalorder %v281, 2
    %v284 = vsel %vm283, %v279, %v12
    %v285 = vlaneseq
    %v286 = vand.u32 %v285, 127
    %v287 = vadd.s32 %v286, 128
    %vm288 = vcmp.lt.s32.totalorder %v287, 161
    %v289 = vsel %vm288, %v284, %v12
    %s290 = scalar_lea.vmem [#allocation13], 104
    %s292 = ssub.s32 256, 1
    %293 = vst [vmem:[%s290] sm:%s292] %v289
    %s294 = scalar_lea.vmem %s5, 28
    %v295 = vld [vmem:[%s294] sm:$0x3]
    %v296 = vlaneseq
    %v297 = vshrl.u32 %v296, 7
    %vm299 = vcmp.lt.s32.totalorder %v297, 2
    %v300 = vsel %vm299, %v295, %v12
    %v301 = vlaneseq
    %v302 = vand.u32 %v301, 127
    %vm304 = vcmp.lt.s32.totalorder %v302, 161
    %v305 = vsel %vm304, %v300, %v12
    %s306 = scalar_lea.vmem [#allocation13], 112
    %s308 = ssub.s32 256, 1
    %309 = vst [vmem:[%s306] sm:%s308] %v305
    %s310 = scalar_lea.vmem %s5, 30
    %v311 = vld [vmem:[%s310] sm:$0x3]
    %v312 = vlaneseq
    %v313 = vshrl.u32 %v312, 7
    %vm315 = vcmp.lt.s32.totalorder %v313, 2
    %v316 = vsel %vm315, %v311, %v12
    %v317 = vlaneseq
    %v318 = vand.u32 %v317, 127
    %v319 = vadd.s32 %v318, 128
    %vm320 = vcmp.lt.s32.totalorder %v319, 161
    %v321 = vsel %vm320, %v316, %v12
    %s322 = scalar_lea.vmem [#allocation13], 120
    %s324 = ssub.s32 256, 1
    %325 = vst [vmem:[%s322] sm:%s324] %v321
    %v326 = vld [vmem:[#allocation13] sm:$0xff]
    %v327 = vld [vmem:[#allocation13 + $0x8] sm:$0xff]
    %v328 = vld [vmem:[#allocation13 + $0x10] sm:$0xff]
    %v329 = vld [vmem:[#allocation13 + $0x18] sm:$0xff]
    %v330 = vld [vmem:[#allocation13 + $0x20] sm:$0xff]
    %v331 = vld [vmem:[#allocation13 + $0x28] sm:$0xff]
    %v332 = vld [vmem:[#allocation13 + $0x30] sm:$0xff]
    %v333 = vld [vmem:[#allocation13 + $0x38] sm:$0xff]
    %v334 = vld [vmem:[#allocation13 + $0x40] sm:$0xff]
    %v335 = vld [vmem:[#allocation13 + $0x48] sm:$0xff]
    %v336 = vld [vmem:[#allocation13 + $0x50] sm:$0xff]
    %v337 = vld [vmem:[#allocation13 + $0x58] sm:$0xff]
    %v338 = vld [vmem:[#allocation13 + $0x60] sm:$0xff]
    %v339 = vld [vmem:[#allocation13 + $0x68] sm:$0xff]
    %v340 = vld [vmem:[#allocation13 + $0x70] sm:$0xff]
    %v341 = vld [vmem:[#allocation13 + $0x78] sm:$0xff]
    %v342 = vld [vmem:[#allocation8] sm:$0xff]
    %v343 = vld [vmem:[#allocation8 + $0x8] sm:$0xff]
    %v344 = vld [vmem:[#allocation8 + $0x10] sm:$0xff]
    %v345 = vld [vmem:[#allocation8 + $0x18] sm:$0xff]
    %v346 = vld [vmem:[#allocation8 + $0x20] sm:$0xff]
    %v347 = vld [vmem:[#allocation8 + $0x28] sm:$0xff]
    %v348 = vld [vmem:[#allocation8 + $0x30] sm:$0xff]
    %v349 = vld [vmem:[#allocation8 + $0x38] sm:$0xff]
    %v350 = vld [vmem:[#allocation8 + $0x40] sm:$0xff]
    %v351 = vld [vmem:[#allocation8 + $0x48] sm:$0xff]
    %v352 = vld [vmem:[#allocation8 + $0x50] sm:$0xff]
    %v353 = vld [vmem:[#allocation8 + $0x58] sm:$0xff]
    %v354 = vld [vmem:[#allocation8 + $0x60] sm:$0xff]
    %v355 = vld [vmem:[#allocation8 + $0x68] sm:$0xff]
    %v356 = vld [vmem:[#allocation8 + $0x70] sm:$0xff]
    %v357 = vld [vmem:[#allocation8 + $0x78] sm:$0xff]
    %v358 = vld [vmem:[#allocation8 + $0x80] sm:$0xff]
    %v359 = vld [vmem:[#allocation8 + $0x88] sm:$0xff]
    %v360 = vld [vmem:[#allocation8 + $0x90] sm:$0xff]
    %v361 = vld [vmem:[#allocation8 + $0x98] sm:$0xff]
    %v362 = vld [vmem:[#allocation8 + $0xa0] sm:$0xff]
    %v363 = vld [vmem:[#allocation8 + $0xa8] sm:$0xff]
    %v364 = vld [vmem:[#allocation8 + $0xb0] sm:$0xff]
    %v365 = vld [vmem:[#allocation8 + $0xb8] sm:$0xff]
    %v366 = vld [vmem:[#allocation8 + $0xc0] sm:$0xff]
    %v367 = vld [vmem:[#allocation8 + $0xc8] sm:$0xff]
    %v368 = vld [vmem:[#allocation8 + $0xd0] sm:$0xff]
    %v369 = vld [vmem:[#allocation8 + $0xd8] sm:$0xff]
    %v370 = vld [vmem:[#allocation8 + $0xe0] sm:$0xff]
    %v371 = vld [vmem:[#allocation8 + $0xe8] sm:$0xff]
    %v372 = vld [vmem:[#allocation8 + $0xf0] sm:$0xff]
    %v373 = vld [vmem:[#allocation8 + $0xf8] sm:$0xff]
    %v374 = vld [vmem:[%s2] sm:$0x1]
    %v376 = vperm.slane %v374, 0
    %378 = vmatpush.msra.mxu0 %v357
    %379 = vmatpush.msra.mxu0 %v356
    %380 = vmatpush.msra.mxu0 %v355
    %381 = vmatpush.msra.mxu0 %v354
    %382 = vmatpush.msra.mxu0 %v353
    %383 = vmatpush.msra.mxu0 %v352
    %384 = vmatpush.msra.mxu0 %v351
    %385 = vmatpush.msra.mxu0 %v350
    %386 = vmatpush.msra.mxu0 %v349
    %387 = vmatpush.msra.mxu0 %v348
    %388 = vmatpush.msra.mxu0 %v347
    %389 = vmatpush.msra.mxu0 %v346
    %390 = vmatpush.msra.mxu0 %v345
    %391 = vmatpush.msra.mxu0 %v344
    %392 = vmatpush.msra.mxu0 %v343
    %393 = vmatpush.msra.mxu0 %v342
    %394 = vmatmul.f32.gmra.mxu0 %v326
    %v395 = vpop.f32.mrf.mxu0
    %v396 = vadd.f32 %v376, %v395
    %397 = vmatmul.f32.gmra.mxu0 %v328
    %v398 = vpop.f32.mrf.mxu0
    %v399 = vadd.f32 %v376, %v398
    %400 = vmatmul.f32.gmra.mxu0 %v330
    %v401 = vpop.f32.mrf.mxu0
    %v402 = vadd.f32 %v376, %v401
    %403 = vmatmul.f32.gmra.mxu0 %v332
    %v404 = vpop.f32.mrf.mxu0
    %v405 = vadd.f32 %v376, %v404
    %406 = vmatmul.f32.gmra.mxu0 %v334
    %v407 = vpop.f32.mrf.mxu0
    %v408 = vadd.f32 %v376, %v407
    %409 = vmatmul.f32.gmra.mxu0 %v336
    %v410 = vpop.f32.mrf.mxu0
    %v411 = vadd.f32 %v376, %v410
    %412 = vmatmul.f32.gmra.mxu0 %v338
    %v413 = vpop.f32.mrf.mxu0
    %v414 = vadd.f32 %v376, %v413
    %415 = vmatmul.f32.gmra.mxu0 %v340
    %v416 = vpop.f32.mrf.mxu0
    %v417 = vadd.f32 %v376, %v416
    %418 = vdwg.mxu0
    %419 = vmatpush.msra.mxu0 %v373
    %420 = vmatpush.msra.mxu0 %v372
    %421 = vmatpush.msra.mxu0 %v371
    %422 = vmatpush.msra.mxu0 %v370
    %423 = vmatpush.msra.mxu0 %v369
    %424 = vmatpush.msra.mxu0 %v368
    %425 = vmatpush.msra.mxu0 %v367
    %426 = vmatpush.msra.mxu0 %v366
    %427 = vmatpush.msra.mxu0 %v365
    %428 = vmatpush.msra.mxu0 %v364
    %429 = vmatpush.msra.mxu0 %v363
    %430 = vmatpush.msra.mxu0 %v362
    %431 = vmatpush.msra.mxu0 %v361
    %432 = vmatpush.msra.mxu0 %v360
    %433 = vmatpush.msra.mxu0 %v359
    %434 = vmatpush.msra.mxu0 %v358
    %435 = vmatmul.f32.gmra.mxu0 %v327
    %v436 = vpop.f32.mrf.mxu0
    %v437 = vadd.f32 %v396, %v436
    %438 = vmatmul.f32.gmra.mxu0 %v329
    %v439 = vpop.f32.mrf.mxu0
    %v440 = vadd.f32 %v399, %v439
    %441 = vmatmul.f32.gmra.mxu0 %v331
    %v442 = vpop.f32.mrf.mxu0
    %v443 = vadd.f32 %v402, %v442
    %444 = vmatmul.f32.gmra.mxu0 %v333
    %v445 = vpop.f32.mrf.mxu0
    %v446 = vadd.f32 %v405, %v445
    %447 = vmatmul.f32.gmra.mxu0 %v335
    %v448 = vpop.f32.mrf.mxu0
    %v449 = vadd.f32 %v408, %v448
    %450 = vmatmul.f32.gmra.mxu0 %v337
    %v451 = vpop.f32.mrf.mxu0
    %v452 = vadd.f32 %v411, %v451
    %453 = vmatmul.f32.gmra.mxu0 %v339
    %v454 = vpop.f32.mrf.mxu0
    %v455 = vadd.f32 %v414, %v454
    %456 = vmatmul.f32.gmra.mxu0 %v341
    %v457 = vpop.f32.mrf.mxu0
    %v458 = vadd.f32 %v417, %v457
    %459 = vdwg.mxu0
    %460 = vst [vmem:[#allocation2] sm:$0xff] %v437
    %461 = vst [vmem:[#allocation2 + $0x8] sm:$0xff] %v440
    %462 = vst [vmem:[#allocation2 + $0x10] sm:$0xff] %v443
    %463 = vst [vmem:[#allocation2 + $0x18] sm:$0xff] %v446
    %464 = vst [vmem:[#allocation2 + $0x20] sm:$0xff] %v449
    %465 = vst [vmem:[#allocation2 + $0x28] sm:$0xff] %v452
    %466 = vst [vmem:[#allocation2 + $0x30] sm:$0xff] %v455
    %467 = vst [vmem:[#allocation2 + $0x38] sm:$0xff] %v458
    %v468 = vld [vmem:[#allocation10] sm:$0xff]
    %v469 = vld [vmem:[#allocation10 + $0x8] sm:$0xff]
    %v470 = vld [vmem:[#allocation10 + $0x10] sm:$0xff]
    %v471 = vld [vmem:[#allocation10 + $0x18] sm:$0xff]
    %v472 = vld [vmem:[#allocation10 + $0x20] sm:$0xff]
    %v473 = vld [vmem:[#allocation10 + $0x28] sm:$0xff]
    %v474 = vld [vmem:[#allocation10 + $0x30] sm:$0xff]
    %v475 = vld [vmem:[#allocation10 + $0x38] sm:$0xff]
    %v476 = vld [vmem:[#allocation10 + $0x40] sm:$0xff]
    %v477 = vld [vmem:[#allocation10 + $0x48] sm:$0xff]
    %v478 = vld [vmem:[#allocation10 + $0x50] sm:$0xff]
    %v479 = vld [vmem:[#allocation10 + $0x58] sm:$0xff]
    %v480 = vld [vmem:[#allocation10 + $0x60] sm:$0xff]
    %v481 = vld [vmem:[#allocation10 + $0x68] sm:$0xff]
    %v482 = vld [vmem:[#allocation10 + $0x70] sm:$0xff]
    %v483 = vld [vmem:[#allocation10 + $0x78] sm:$0xff]
    %v484 = vld [vmem:[#allocation2] sm:$0xff]
    %v485 = vtanh.pop %v484
    %v486 = vld [vmem:[#allocation2 + $0x8] sm:$0xff]
    %487 = vmatpush.msra.mxu0 %v483
    %488 = vmatpush.msra.mxu0 %v482
    %489 = vmatpush.msra.mxu0 %v481
    %490 = vmatpush.msra.mxu0 %v480
    %491 = vmatpush.msra.mxu0 %v479
    %492 = vmatpush.msra.mxu0 %v478
    %493 = vmatpush.msra.mxu0 %v477
    %494 = vmatpush.msra.mxu0 %v476
    %495 = vmatpush.msra.mxu0 %v475
    %496 = vmatpush.msra.mxu0 %v474
    %497 = vmatpush.msra.mxu0 %v473
    %498 = vmatpush.msra.mxu0 %v472
    %499 = vmatpush.msra.mxu0 %v471
    %500 = vmatpush.msra.mxu0 %v470
    %501 = vmatpush.msra.mxu0 %v469
    %502 = vmatpush.msra.mxu0 %v468
    %503 = vmatmul.f32.gmra.mxu0 %v485
    %v504 = vpop.f32.mrf.mxu0
    %v505 = vadd.f32 0.0, %v504
    %506 = vdwg.mxu0
    %v507 = vadd.f32 %v486, %v505
    %v508 = vtanh.pop %v507
    %v509 = vld [vmem:[#allocation2 + $0x10] sm:$0xff]
    %510 = vmatpush.msra.mxu0 %v483
    %511 = vmatpush.msra.mxu0 %v482
    %512 = vmatpush.msra.mxu0 %v481
    %513 = vmatpush.msra.mxu0 %v480
    %514 = vmatpush.msra.mxu0 %v479
    %515 = vmatpush.msra.mxu0 %v478
    %516 = vmatpush.msra.mxu0 %v477
    %517 = vmatpush.msra.mxu0 %v476
    %518 = vmatpush.msra.mxu0 %v475
    %519 = vmatpush.msra.mxu0 %v474
    %520 = vmatpush.msra.mxu0 %v473
    %521 = vmatpush.msra.mxu0 %v472
    %522 = vmatpush.msra.mxu0 %v471
    %523 = vmatpush.msra.mxu0 %v470
    %524 = vmatpush.msra.mxu0 %v469
    %525 = vmatpush.msra.mxu0 %v468
    %526 = vmatmul.f32.gmra.mxu0 %v508
    %v527 = vpop.f32.mrf.mxu0
    %v528 = vadd.f32 0.0, %v527
    %529 = vdwg.mxu0
    %v530 = vadd.f32 %v509, %v528
    %v531 = vtanh.pop %v530
    %v532 = vld [vmem:[#allocation2 + $0x18] sm:$0xff]
    %533 = vmatpush.msra.mxu0 %v483
    %534 = vmatpush.msra.mxu0 %v482
    %535 = vmatpush.msra.mxu0 %v481
    %536 = vmatpush.msra.mxu0 %v480
    %537 = vmatpush.msra.mxu0 %v479
    %538 = vmatpush.msra.mxu0 %v478
    %539 = vmatpush.msra.mxu0 %v477
    %540 = vmatpush.msra.mxu0 %v476
    %541 = vmatpush.msra.mxu0 %v475
    %542 = vmatpush.msra.mxu0 %v474
    %543 = vmatpush.msra.mxu0 %v473
    %544 = vmatpush.msra.mxu0 %v472
    %545 = vmatpush.msra.mxu0 %v471
    %546 = vmatpush.msra.mxu0 %v470
    %547 = vmatpush.msra.mxu0 %v469
    %548 = vmatpush.msra.mxu0 %v468
    %549 = vmatmul.f32.gmra.mxu0 %v531
    %v550 = vpop.f32.mrf.mxu0
    %v551 = vadd.f32 0.0, %v550
    %552 = vdwg.mxu0
    %v553 = vadd.f32 %v532, %v551
    %v554 = vtanh.pop %v553
    %v555 = vld [vmem:[#allocation2 + $0x20] sm:$0xff]
    %556 = vmatpush.msra.mxu0 %v483
    %557 = vmatpush.msra.mxu0 %v482
    %558 = vmatpush.msra.mxu0 %v481
    %559 = vmatpush.msra.mxu0 %v480
    %560 = vmatpush.msra.mxu0 %v479
    %561 = vmatpush.msra.mxu0 %v478
    %562 = vmatpush.msra.mxu0 %v477
    %563 = vmatpush.msra.mxu0 %v476
    %564 = vmatpush.msra.mxu0 %v475
    %565 = vmatpush.msra.mxu0 %v474
    %566 = vmatpush.msra.mxu0 %v473
    %567 = vmatpush.msra.mxu0 %v472
    %568 = vmatpush.msra.mxu0 %v471
    %569 = vmatpush.msra.mxu0 %v470
    %570 = vmatpush.msra.mxu0 %v469
    %571 = vmatpush.msra.mxu0 %v468
    %572 = vmatmul.f32.gmra.mxu0 %v554
    %v573 = vpop.f32.mrf.mxu0
    %v574 = vadd.f32 0.0, %v573
    %575 = vdwg.mxu0
    %v576 = vadd.f32 %v555, %v574
    %v577 = vtanh.pop %v576
    %v578 = vld [vmem:[#allocation2 + $0x28] sm:$0xff]
    %579 = vmatpush.msra.mxu0 %v483
    %580 = vmatpush.msra.mxu0 %v482
    %581 = vmatpush.msra.mxu0 %v481
    %582 = vmatpush.msra.mxu0 %v480
    %583 = vmatpush.msra.mxu0 %v479
    %584 = vmatpush.msra.mxu0 %v478
    %585 = vmatpush.msra.mxu0 %v477
    %586 = vmatpush.msra.mxu0 %v476
    %587 = vmatpush.msra.mxu0 %v475
    %588 = vmatpush.msra.mxu0 %v474
    %589 = vmatpush.msra.mxu0 %v473
    %590 = vmatpush.msra.mxu0 %v472
    %591 = vmatpush.msra.mxu0 %v471
    %592 = vmatpush.msra.mxu0 %v470
    %593 = vmatpush.msra.mxu0 %v469
    %594 = vmatpush.msra.mxu0 %v468
    %595 = vmatmul.f32.gmra.mxu0 %v577
    %v596 = vpop.f32.mrf.mxu0
    %v597 = vadd.f32 0.0, %v596
    %598 = vdwg.mxu0
    %v599 = vadd.f32 %v578, %v597
    %v600 = vtanh.pop %v599
    %v601 = vld [vmem:[#allocation2 + $0x30] sm:$0xff]
    %602 = vmatpush.msra.mxu0 %v483
    %603 = vmatpush.msra.mxu0 %v482
    %604 = vmatpush.msra.mxu0 %v481
    %605 = vmatpush.msra.mxu0 %v480
    %606 = vmatpush.msra.mxu0 %v479
    %607 = vmatpush.msra.mxu0 %v478
    %608 = vmatpush.msra.mxu0 %v477
    %609 = vmatpush.msra.mxu0 %v476
    %610 = vmatpush.msra.mxu0 %v475
    %611 = vmatpush.msra.mxu0 %v474
    %612 = vmatpush.msra.mxu0 %v473
    %613 = vmatpush.msra.mxu0 %v472
    %614 = vmatpush.msra.mxu0 %v471
    %615 = vmatpush.msra.mxu0 %v470
    %616 = vmatpush.msra.mxu0 %v469
    %617 = vmatpush.msra.mxu0 %v468
    %618 = vmatmul.f32.gmra.mxu0 %v600
    %v619 = vpop.f32.mrf.mxu0
    %v620 = vadd.f32 0.0, %v619
    %621 = vdwg.mxu0
    %v622 = vadd.f32 %v601, %v620
    %v623 = vtanh.pop %v622
    %v624 = vld [vmem:[#allocation2 + $0x38] sm:$0xff]
    %625 = vmatpush.msra.mxu0 %v483
    %626 = vmatpush.msra.mxu0 %v482
    %627 = vmatpush.msra.mxu0 %v481
    %628 = vmatpush.msra.mxu0 %v480
    %629 = vmatpush.msra.mxu0 %v479
    %630 = vmatpush.msra.mxu0 %v478
    %631 = vmatpush.msra.mxu0 %v477
    %632 = vmatpush.msra.mxu0 %v476
    %633 = vmatpush.msra.mxu0 %v475
    %634 = vmatpush.msra.mxu0 %v474
    %635 = vmatpush.msra.mxu0 %v473
    %636 = vmatpush.msra.mxu0 %v472
    %637 = vmatpush.msra.mxu0 %v471
    %638 = vmatpush.msra.mxu0 %v470
    %639 = vmatpush.msra.mxu0 %v469
    %640 = vmatpush.msra.mxu0 %v468
    %641 = vmatmul.f32.gmra.mxu0 %v623
    %v642 = vpop.f32.mrf.mxu0
    %v643 = vadd.f32 0.0, %v642
    %644 = vdwg.mxu0
    %v645 = vadd.f32 %v624, %v643
    %v646 = vtanh.pop %v645
    %v647 = vld [vmem:[#allocation12] sm:$0xff]
    %v648 = vld [vmem:[#allocation12 + $0x8] sm:$0xff]
    %v649 = vld [vmem:[#allocation12 + $0x10] sm:$0xff]
    %v650 = vld [vmem:[#allocation12 + $0x18] sm:$0xff]
    %v651 = vld [vmem:[#allocation12 + $0x20] sm:$0xff]
    %v652 = vld [vmem:[#allocation12 + $0x28] sm:$0xff]
    %v653 = vld [vmem:[#allocation12 + $0x30] sm:$0xff]
    %v654 = vld [vmem:[#allocation12 + $0x38] sm:$0xff]
    %v655 = vld [vmem:[#allocation12 + $0x40] sm:$0xff]
    %v656 = vld [vmem:[#allocation12 + $0x48] sm:$0xff]
    %v657 = vld [vmem:[#allocation12 + $0x50] sm:$0xff]
    %v658 = vld [vmem:[#allocation12 + $0x58] sm:$0xff]
    %v659 = vld [vmem:[#allocation12 + $0x60] sm:$0xff]
    %v660 = vld [vmem:[#allocation12 + $0x68] sm:$0xff]
    %v661 = vld [vmem:[#allocation12 + $0x70] sm:$0xff]
    %v662 = vld [vmem:[#allocation12 + $0x78] sm:$0xff]
    %v663 = vld [vmem:[%s4] sm:$0x1]
    %v665 = vperm.slane %v663, 0
    %667 = vmatpush.msra.mxu0 %v662
    %668 = vmatpush.msra.mxu0 %v661
    %669 = vmatpush.msra.mxu0 %v660
    %670 = vmatpush.msra.mxu0 %v659
    %671 = vmatpush.msra.mxu0 %v658
    %672 = vmatpush.msra.mxu0 %v657
    %673 = vmatpush.msra.mxu0 %v656
    %674 = vmatpush.msra.mxu0 %v655
    %675 = vmatpush.msra.mxu0 %v654
    %676 = vmatpush.msra.mxu0 %v653
    %677 = vmatpush.msra.mxu0 %v652
    %678 = vmatpush.msra.mxu0 %v651
    %679 = vmatpush.msra.mxu0 %v650
    %680 = vmatpush.msra.mxu0 %v649
    %681 = vmatpush.msra.mxu0 %v648
    %682 = vmatpush.msra.mxu0 %v647
    %683 = vmatmul.f32.gmra.mxu0 %v646
    %v684 = vpop.f32.mrf.mxu0
    %v685 = vadd.f32 %v665, %v684
    %686 = vdwg.mxu0
    %687 = vst [vmem:[%s7] sm:$0xff] %v685
    // Predicated region
    $region38: #{rnn_model_forward.2} parent=1 // pred_check
      _
    $region39: #{rnn_model_forward.2} parent=1 // pred_check_branch
      %689 = sbr.rel (0) target = $region41
    $region40: #{rnn_model_forward.2} parent=1 // pred_region
      _
    $region41: #{rnn_model_forward.2} parent=1 // pred_fallthru
      _
    // Predicated region
    $region42: #{rnn_model_forward.2} parent=1 // pred_check
      _
    $region43: #{rnn_model_forward.2} parent=1 // pred_check_branch
      %691 = sbr.rel (0) target = $region45
    $region44: #{rnn_model_forward.2} parent=1 // pred_region
      _
    $region45: #{rnn_model_forward.2} parent=1 // pred_fallthru
      _
    %692 = vsyncpa [#allocation9], 1
    %693 = vsyncpa [#allocation11], 1

</llo_original>
